<compile_context>
chip_gen: v5e
topology: v5e:2x2
jax: 0.10.0
libtpu: 0.0.40
codegen_flags: <defaults>
</compile_context>

<pallas_src>
import jax
import jax.numpy as jnp
from jax.experimental import pallas as pl
from jax.experimental.pallas import tpu as pltpu


# ----------------------------------------------------------------------------
# Model configuration (mirrors the PyTorch InferenceNetwork params).
# ----------------------------------------------------------------------------
class Params:
    channels = (4, 8, 16, 16)
    kernel_size = (3, 3, 3)
    stride = (2, 2, 2)
    hidden_dim = 16        # = channels[3] * 1 * 1 for a 16x16 input
    latent_dim = 8


_EPS = 1e-5


def _gelu(x):
    # TODO(synk): the repo's custom GELU class is the tanh approximation; if
    # the reference uses the exact erf variant, swap in 0.5*x*(1+erf(x/sqrt(2))).
    c = 0.7978845608028654  # sqrt(2/pi)
    return 0.5 * x * (1.0 + jnp.tanh(c * (x + 0.044715 * x * x * x)))


def _bias_gelu_bn(y, p_ref, col0, c):
    """bias -> GELU -> BatchNorm (training-mode batch stats), channel-major.

    y: (c, positions) f32.  p_ref columns col0..col0+2 hold bias/gamma/beta for
    this layer with the channel index on sublanes, so every read broadcasts
    along lanes for free.
    """
    y = y + p_ref[0:c, col0:col0 + 1]
    y = _gelu(y)
    # One-pass batch statistics over all positions (= N*H*W), per channel.
    mean = jnp.mean(y, axis=1, keepdims=True)
    var = jnp.mean(y * y, axis=1, keepdims=True) - mean * mean
    y_hat = (y - mean) * jax.lax.rsqrt(var + _EPS)
    # TODO(synk): training-mode BN (batch statistics); running stats are neither
    # read nor updated, matching a freshly constructed module in train() mode.
    return y_hat * p_ref[0:c, col0 + 1:col0 + 2] + p_ref[0:c, col0 + 2:col0 + 3]


# ----------------------------------------------------------------------------
# The single fused kernel.
# ----------------------------------------------------------------------------
def _make_fused_kernel(n):
    """Whole-network forward for batch size `n` (fixed 4->8->16->16 arch, 16x16 in)."""
    # Layer-1 output columns are grouped by the parity of the 7x7 output
    # coordinates (see _layer1_cols): blocks (i%2, j%2) in order
    # (0,0),(0,1),(1,0),(1,1); inside a block the order is (i//2, j//2, n).
    b00, b01, b10, b11 = 0, 16 * n, 28 * n, 40 * n
    block_off = {(0, 0): b00, (0, 1): b01, (1, 0): b10, (1, 1): b11}

    def kernel(cols1_ref, w_ref, p_ref, out_ref):
        # ------------------ conv0: 4->8, k3 s2, 16x16 -> 7x7 ------------------
        y = jnp.dot(w_ref[:, 0:36], cols1_ref[...],
                    preferred_element_type=jnp.float32)            # (16, 49n)
        a1 = _bias_gelu_bn(y[0:8, :], p_ref, 0, 8)                 # (8, 49n)

        # ------------------ conv1: 8->16, k3 s2, 7x7 -> 3x3 -------------------
        # im2col of a1 built purely from contiguous lane slices thanks to the
        # parity-grouped column order.  Rows ordered (kh, kw, c_in) to match the
        # packed weight; columns ordered (oi, oj, n).
        pieces = []
        for kh in range(3):
            for kw in range(3):
                pa, da = kh & 1, kh >> 1
                pb, db = kw & 1, kw >> 1
                base = block_off[(pa, pb)]
                if pb == 1:
                    # odd column parity: one contiguous 9n-wide run
                    start = base + da * 3 * n
                    pieces.append(a1[:, start:start + 9 * n])
                else:
                    # even column parity: three 3n-wide runs (one per output row)
                    row_w = 4 * n
                    subs = [
                        a1[:, base + (oi + da) * row_w + db * n:
                              base + (oi + da) * row_w + db * n + 3 * n]
                        for oi in range(3)
                    ]
                    pieces.append(jnp.concatenate(subs, axis=1))
        cols2 = jnp.concatenate(pieces, axis=0).astype(jnp.bfloat16)   # (72, 9n)
        y = jnp.dot(w_ref[:, 36:108], cols2,
                    preferred_element_type=jnp.float32)            # (16, 9n)
        a2 = _bias_gelu_bn(y, p_ref, 3, 16)

        # ------------------ conv2: 16->16, k3 s2, 3x3 -> 1x1 ------------------
        # The 3x3 kernel covers the whole 3x3 input; a2's columns are already in
        # (kh, kw, n) order, so im2col is 9 contiguous n-wide slices.
        cols3 = jnp.concatenate([a2[:, k * n:(k + 1) * n] for k in range(9)],
                                axis=0).astype(jnp.bfloat16)       # (144, n)
        y = jnp.dot(w_ref[:, 108:252], cols3,
                    preferred_element_type=jnp.float32)            # (16, n)
        a3 = _bias_gelu_bn(y, p_ref, 6, 16)

        # ------------------ Flatten + fc_latent + GELU ------------------------
        z = jnp.dot(w_ref[:, 252:268], a3.astype(jnp.bfloat16),
                    preferred_element_type=jnp.float32)            # (16, n)
        z = _gelu(z[0:8, :] + p_ref[0:8, 9:10])                    # (latent, n)
        out_ref[...] = z

    return kernel


# ----------------------------------------------------------------------------
# Host-side layout plumbing (runs once per call / once at init).
# ----------------------------------------------------------------------------
def _layer1_cols(x):
    """im2col for conv0 with a kernel-friendly column order.

    x: (N, 4, 16, 16) -> (36, 49*N).  Rows ordered (c, kh, kw); columns grouped
    by the parity of the 7x7 output coordinates so that layer-2's stride-2
    patch extraction is contiguous inside the fused kernel.
    """
    n, c, h, w = x.shape
    k, s = 3, 2
    ho, wo = (h - k) // s + 1, (w - k) // s + 1                    # 7, 7
    # pat[n, c, kh*3+kw, i, j] = x[n, c, s*i+kh, s*j+kw]
    pat = jnp.stack(
        [x[:, :, kh:kh + s * (ho - 1) + 1:s, kw:kw + s * (wo - 1) + 1:s]
         for kh in range(k) for kw in range(k)], axis=2)           # (N, C, 9, 7, 7)
    a = pat.transpose(1, 2, 0, 3, 4).reshape(c * k * k, n, ho, wo)  # (36, N, 7, 7)
    blocks = []
    for pa in range(2):
        for pb in range(2):
            blk = a[:, :, pa::2, pb::2]                            # (36, N, Ha, Wb)
            blk = blk.transpose(0, 2, 3, 1)                        # (36, Ha, Wb, N)
            blocks.append(blk.reshape(c * k * k, -1))
    return jnp.concatenate(blocks, axis=1)                         # (36, 49*N)


def init_params(key, p):
    """PyTorch-layout parameters (Conv2d / BatchNorm2d / Linear)."""
    keys = jax.random.split(key, 8)
    params = {}
    for li in range(3):
        cin, cout = p.channels[li], p.channels[li + 1]
        k = p.kernel_size[li]
        params[f"conv{li}_w"] = (
            jax.random.normal(keys[2 * li], (cout, cin, k, k), jnp.float32) * 0.1)
        params[f"conv{li}_b"] = (
            jax.random.normal(keys[2 * li + 1], (cout,), jnp.float32) * 0.01)
        params[f"bn{li}_gamma"] = jnp.ones((cout,), jnp.float32)
        params[f"bn{li}_beta"] = jnp.zeros((cout,), jnp.float32)
    params["fc_w"] = (
        jax.random.normal(keys[6], (p.latent_dim, p.hidden_dim), jnp.float32) * 0.1)
    params["fc_b"] = jax.random.normal(keys[7], (p.latent_dim,), jnp.float32) * 0.01
    return params


def pack_params(params, p):
    """One-time repack into the fused kernel's two operands.

    w_all (16, 268) bf16: [0:36]    conv0 weight (rows=Cout, cols=(c,kh,kw))
                          [36:108]  conv1 weight (cols=(kh,kw,c))
                          [108:252] conv2 weight (cols=(kh,kw,c))
                          [252:268] fc_latent weight (8, 16)
    pbuf  (16, 10) f32:   cols 3l..3l+2 = conv-l bias / BN gamma / BN beta,
                          col 9 = fc bias (channel index on sublanes).
    """
    w_all = jnp.zeros((16, 268), jnp.float32)
    w_all = w_all.at[0:8, 0:36].set(params["conv0_w"].reshape(8, 36))
    w_all = w_all.at[:, 36:108].set(
        params["conv1_w"].transpose(0, 2, 3, 1).reshape(16, 72))
    w_all = w_all.at[:, 108:252].set(
        params["conv2_w"].transpose(0, 2, 3, 1).reshape(16, 144))
    w_all = w_all.at[0:8, 252:268].set(params["fc_w"])

    pbuf = jnp.zeros((16, 10), jnp.float32)
    for li in range(3):
        cout = p.channels[li + 1]
        pbuf = pbuf.at[0:cout, 3 * li + 0].set(params[f"conv{li}_b"])
        pbuf = pbuf.at[0:cout, 3 * li + 1].set(params[f"bn{li}_gamma"])
        pbuf = pbuf.at[0:cout, 3 * li + 2].set(params[f"bn{li}_beta"])
    pbuf = pbuf.at[0:p.latent_dim, 9].set(params["fc_b"])
    return w_all.astype(jnp.bfloat16), pbuf


# ----------------------------------------------------------------------------
# Forward pass.
# ----------------------------------------------------------------------------
_VMEM = pl.BlockSpec(memory_space=pltpu.MemorySpace.VMEM)


@jax.jit
def inference_network_forward(x, w_all, pbuf):
    """x: (N, 4, 16, 16) f32 -> z: (N, latent_dim) f32."""
    n = x.shape[0]
    cols1 = _layer1_cols(x).astype(jnp.bfloat16)                   # (36, 49n)
    z_t = pl.pallas_call(
        _make_fused_kernel(n),
        out_shape=jax.ShapeDtypeStruct((Params.latent_dim, n), jnp.float32),
        in_specs=[_VMEM, _VMEM, _VMEM],
        out_specs=_VMEM,
        # TODO(synk): add a batch-tiled grid with dimension_semantics=("parallel",)
        # to shard across v7x's two TensorCores once N grows beyond toy size.
    )(cols1, w_all, pbuf)
    # (latent, N) -> (N, latent): a 64-byte transpose left to XLA rather than a
    # degenerate in-kernel relayout.
    return z_t.T


if __name__ == "__main__":
    p = Params()
    key = jax.random.PRNGKey(0)
    k_x, k_p = jax.random.split(key)
    x = jax.random.normal(k_x, (2, p.channels[0], 16, 16), jnp.float32)
    params = init_params(k_p, p)
    w_all, pbuf = pack_params(params, p)

    z = inference_network_forward(x, w_all, pbuf)
    jax.block_until_ready(z)
    assert z.shape == (2, p.latent_dim), z.shape
    print("KERNEL_OK")
</pallas_src>

<mosaic_0001>
module attributes {stable_mosaic.version = 11 : i64} {
  func.func @kernel(%arg0: memref<36x98xbf16, #tpu.memory_space<vmem>>, %arg1: memref<16x268xbf16, #tpu.memory_space<vmem>>, %arg2: memref<16x10xf32, #tpu.memory_space<vmem>>, %arg3: memref<8x2xf32, #tpu.memory_space<vmem>>) attributes {dimension_semantics = [], scalar_prefetch = 0 : i64, scratch_operands = 0 : i64, tpu.core_type = #tpu.core_type<tc>} {
    %c0 = arith.constant 0 : index
    %c0_0 = arith.constant 0 : index
    %0 = vector.load %arg1[%c0, %c0_0] : memref<16x268xbf16, #tpu.memory_space<vmem>>, vector<16x36xbf16>
    %c0_1 = arith.constant 0 : index
    %c0_2 = arith.constant 0 : index
    %1 = vector.load %arg0[%c0_1, %c0_2] : memref<36x98xbf16, #tpu.memory_space<vmem>>, vector<36x98xbf16>
    %cst = arith.constant dense<0.000000e+00> : vector<16x98xf32>
    %2 = tpu.matmul %0, %1, %cst {dimension_numbers = #tpu.dot_dimension_numbers<[1], [0], [0], [1], [0, 0, 1, 1], [], []>} : vector<16x36xbf16>, vector<36x98xbf16>, vector<16x98xf32> -> vector<16x98xf32>
    %3 = vector.extract_strided_slice %2 {offsets = [0, 0], sizes = [8, 98], strides = [1, 1]} : vector<16x98xf32> to vector<8x98xf32>
    %c0_3 = arith.constant 0 : index
    %c0_4 = arith.constant 0 : index
    %4 = vector.load %arg2[%c0_3, %c0_4] : memref<16x10xf32, #tpu.memory_space<vmem>>, vector<8x1xf32>
    %5 = vector.broadcast %4 : vector<8x1xf32> to vector<8x98xf32>
    %6 = arith.addf %3, %5 : vector<8x98xf32>
    %cst_5 = arith.constant 5.000000e-01 : f32
    %7 = vector.broadcast %cst_5 : f32 to vector<8x98xf32>
    %8 = arith.mulf %7, %6 : vector<8x98xf32>
    %cst_6 = arith.constant 4.471500e-02 : f32
    %9 = vector.broadcast %cst_6 : f32 to vector<8x98xf32>
    %10 = arith.mulf %9, %6 : vector<8x98xf32>
    %11 = arith.mulf %10, %6 : vector<8x98xf32>
    %12 = arith.mulf %11, %6 : vector<8x98xf32>
    %13 = arith.addf %6, %12 : vector<8x98xf32>
    %cst_7 = arith.constant 0.797884583 : f32
    %14 = vector.broadcast %cst_7 : f32 to vector<8x98xf32>
    %15 = arith.mulf %14, %13 : vector<8x98xf32>
    %16 = math.tanh %15 : vector<8x98xf32>
    %cst_8 = arith.constant 1.000000e+00 : f32
    %17 = vector.broadcast %cst_8 : f32 to vector<8x98xf32>
    %18 = arith.addf %17, %16 : vector<8x98xf32>
    %19 = arith.mulf %8, %18 : vector<8x98xf32>
    %cst_9 = arith.constant dense<0.000000e+00> : vector<8xf32>
    %20 = vector.multi_reduction <add>, %19, %cst_9 [1] : vector<8x98xf32> to vector<8xf32>
    %21 = vector.shape_cast %20 : vector<8xf32> to vector<8x1xf32>
    %cst_10 = arith.constant 9.800000e+01 : f32
    %22 = vector.broadcast %cst_10 : f32 to vector<8x1xf32>
    %23 = arith.divf %21, %22 : vector<8x1xf32>
    %24 = arith.mulf %19, %19 : vector<8x98xf32>
    %cst_11 = arith.constant dense<0.000000e+00> : vector<8xf32>
    %25 = vector.multi_reduction <add>, %24, %cst_11 [1] : vector<8x98xf32> to vector<8xf32>
    %26 = vector.shape_cast %25 : vector<8xf32> to vector<8x1xf32>
    %cst_12 = arith.constant 9.800000e+01 : f32
    %27 = vector.broadcast %cst_12 : f32 to vector<8x1xf32>
    %28 = arith.divf %26, %27 : vector<8x1xf32>
    %29 = arith.mulf %23, %23 : vector<8x1xf32>
    %30 = arith.subf %28, %29 : vector<8x1xf32>
    %31 = vector.broadcast %23 : vector<8x1xf32> to vector<8x98xf32>
    %32 = arith.subf %19, %31 : vector<8x98xf32>
    %cst_13 = arith.constant 9.99999974E-6 : f32
    %33 = vector.broadcast %cst_13 : f32 to vector<8x1xf32>
    %34 = arith.addf %30, %33 : vector<8x1xf32>
    %35 = math.rsqrt %34 : vector<8x1xf32>
    %36 = vector.broadcast %35 : vector<8x1xf32> to vector<8x98xf32>
    %37 = arith.mulf %32, %36 : vector<8x98xf32>
    %c0_14 = arith.constant 0 : index
    %c1 = arith.constant 1 : index
    %38 = vector.load %arg2[%c0_14, %c1] : memref<16x10xf32, #tpu.memory_space<vmem>>, vector<8x1xf32>
    %39 = vector.broadcast %38 : vector<8x1xf32> to vector<8x98xf32>
    %40 = arith.mulf %37, %39 : vector<8x98xf32>
    %c0_15 = arith.constant 0 : index
    %c2 = arith.constant 2 : index
    %41 = vector.load %arg2[%c0_15, %c2] : memref<16x10xf32, #tpu.memory_space<vmem>>, vector<8x1xf32>
    %42 = vector.broadcast %41 : vector<8x1xf32> to vector<8x98xf32>
    %43 = arith.addf %40, %42 : vector<8x98xf32>
    %44 = vector.extract_strided_slice %43 {offsets = [0, 0], sizes = [8, 6], strides = [1, 1]} : vector<8x98xf32> to vector<8x6xf32>
    %45 = vector.extract_strided_slice %43 {offsets = [0, 8], sizes = [8, 6], strides = [1, 1]} : vector<8x98xf32> to vector<8x6xf32>
    %46 = vector.extract_strided_slice %43 {offsets = [0, 16], sizes = [8, 6], strides = [1, 1]} : vector<8x98xf32> to vector<8x6xf32>
    %47 = tpu.concatenate %44, %45, %46 in 1 : vector<8x6xf32>, vector<8x6xf32>, vector<8x6xf32> -> vector<8x18xf32>
    %48 = vector.extract_strided_slice %43 {offsets = [0, 32], sizes = [8, 18], strides = [1, 1]} : vector<8x98xf32> to vector<8x18xf32>
    %49 = vector.extract_strided_slice %43 {offsets = [0, 2], sizes = [8, 6], strides = [1, 1]} : vector<8x98xf32> to vector<8x6xf32>
    %50 = vector.extract_strided_slice %43 {offsets = [0, 10], sizes = [8, 6], strides = [1, 1]} : vector<8x98xf32> to vector<8x6xf32>
    %51 = vector.extract_strided_slice %43 {offsets = [0, 18], sizes = [8, 6], strides = [1, 1]} : vector<8x98xf32> to vector<8x6xf32>
    %52 = tpu.concatenate %49, %50, %51 in 1 : vector<8x6xf32>, vector<8x6xf32>, vector<8x6xf32> -> vector<8x18xf32>
    %53 = vector.extract_strided_slice %43 {offsets = [0, 56], sizes = [8, 6], strides = [1, 1]} : vector<8x98xf32> to vector<8x6xf32>
    %54 = vector.extract_strided_slice %43 {offsets = [0, 64], sizes = [8, 6], strides = [1, 1]} : vector<8x98xf32> to vector<8x6xf32>
    %55 = vector.extract_strided_slice %43 {offsets = [0, 72], sizes = [8, 6], strides = [1, 1]} : vector<8x98xf32> to vector<8x6xf32>
    %56 = tpu.concatenate %53, %54, %55 in 1 : vector<8x6xf32>, vector<8x6xf32>, vector<8x6xf32> -> vector<8x18xf32>
    %57 = vector.extract_strided_slice %43 {offsets = [0, 80], sizes = [8, 18], strides = [1, 1]} : vector<8x98xf32> to vector<8x18xf32>
    %58 = vector.extract_strided_slice %43 {offsets = [0, 58], sizes = [8, 6], strides = [1, 1]} : vector<8x98xf32> to vector<8x6xf32>
    %59 = vector.extract_strided_slice %43 {offsets = [0, 66], sizes = [8, 6], strides = [1, 1]} : vector<8x98xf32> to vector<8x6xf32>
    %60 = vector.extract_strided_slice %43 {offsets = [0, 74], sizes = [8, 6], strides = [1, 1]} : vector<8x98xf32> to vector<8x6xf32>
    %61 = tpu.concatenate %58, %59, %60 in 1 : vector<8x6xf32>, vector<8x6xf32>, vector<8x6xf32> -> vector<8x18xf32>
    %62 = vector.extract_strided_slice %43 {offsets = [0, 8], sizes = [8, 6], strides = [1, 1]} : vector<8x98xf32> to vector<8x6xf32>
    %63 = vector.extract_strided_slice %43 {offsets = [0, 16], sizes = [8, 6], strides = [1, 1]} : vector<8x98xf32> to vector<8x6xf32>
    %64 = vector.extract_strided_slice %43 {offsets = [0, 24], sizes = [8, 6], strides = [1, 1]} : vector<8x98xf32> to vector<8x6xf32>
    %65 = tpu.concatenate %62, %63, %64 in 1 : vector<8x6xf32>, vector<8x6xf32>, vector<8x6xf32> -> vector<8x18xf32>
    %66 = vector.extract_strided_slice %43 {offsets = [0, 38], sizes = [8, 18], strides = [1, 1]} : vector<8x98xf32> to vector<8x18xf32>
    %67 = vector.extract_strided_slice %43 {offsets = [0, 10], sizes = [8, 6], strides = [1, 1]} : vector<8x98xf32> to vector<8x6xf32>
    %68 = vector.extract_strided_slice %43 {offsets = [0, 18], sizes = [8, 6], strides = [1, 1]} : vector<8x98xf32> to vector<8x6xf32>
    %69 = vector.extract_strided_slice %43 {offsets = [0, 26], sizes = [8, 6], strides = [1, 1]} : vector<8x98xf32> to vector<8x6xf32>
    %70 = tpu.concatenate %67, %68, %69 in 1 : vector<8x6xf32>, vector<8x6xf32>, vector<8x6xf32> -> vector<8x18xf32>
    %71 = tpu.concatenate %47, %48, %52, %56, %57, %61, %65, %66, %70 in 0 : vector<8x18xf32>, vector<8x18xf32>, vector<8x18xf32>, vector<8x18xf32>, vector<8x18xf32>, vector<8x18xf32>, vector<8x18xf32>, vector<8x18xf32>, vector<8x18xf32> -> vector<72x18xf32>
    %72 = arith.truncf %71 : vector<72x18xf32> to vector<72x18xbf16>
    %c0_16 = arith.constant 0 : index
    %c36 = arith.constant 36 : index
    %73 = vector.load %arg1[%c0_16, %c36] : memref<16x268xbf16, #tpu.memory_space<vmem>>, vector<16x72xbf16>
    %cst_17 = arith.constant dense<0.000000e+00> : vector<16x18xf32>
    %74 = tpu.matmul %73, %72, %cst_17 {dimension_numbers = #tpu.dot_dimension_numbers<[1], [0], [0], [1], [0, 0, 1, 1], [], []>} : vector<16x72xbf16>, vector<72x18xbf16>, vector<16x18xf32> -> vector<16x18xf32>
    %c0_18 = arith.constant 0 : index
    %c3 = arith.constant 3 : index
    %75 = vector.load %arg2[%c0_18, %c3] : memref<16x10xf32, #tpu.memory_space<vmem>>, vector<16x1xf32>
    %76 = vector.broadcast %75 : vector<16x1xf32> to vector<16x18xf32>
    %77 = arith.addf %74, %76 : vector<16x18xf32>
    %cst_19 = arith.constant 5.000000e-01 : f32
    %78 = vector.broadcast %cst_19 : f32 to vector<16x18xf32>
    %79 = arith.mulf %78, %77 : vector<16x18xf32>
    %cst_20 = arith.constant 4.471500e-02 : f32
    %80 = vector.broadcast %cst_20 : f32 to vector<16x18xf32>
    %81 = arith.mulf %80, %77 : vector<16x18xf32>
    %82 = arith.mulf %81, %77 : vector<16x18xf32>
    %83 = arith.mulf %82, %77 : vector<16x18xf32>
    %84 = arith.addf %77, %83 : vector<16x18xf32>
    %cst_21 = arith.constant 0.797884583 : f32
    %85 = vector.broadcast %cst_21 : f32 to vector<16x18xf32>
    %86 = arith.mulf %85, %84 : vector<16x18xf32>
    %87 = math.tanh %86 : vector<16x18xf32>
    %cst_22 = arith.constant 1.000000e+00 : f32
    %88 = vector.broadcast %cst_22 : f32 to vector<16x18xf32>
    %89 = arith.addf %88, %87 : vector<16x18xf32>
    %90 = arith.mulf %79, %89 : vector<16x18xf32>
    %cst_23 = arith.constant dense<0.000000e+00> : vector<16xf32>
    %91 = vector.multi_reduction <add>, %90, %cst_23 [1] : vector<16x18xf32> to vector<16xf32>
    %92 = vector.shape_cast %91 : vector<16xf32> to vector<16x1xf32>
    %cst_24 = arith.constant 1.800000e+01 : f32
    %93 = vector.broadcast %cst_24 : f32 to vector<16x1xf32>
    %94 = arith.divf %92, %93 : vector<16x1xf32>
    %95 = arith.mulf %90, %90 : vector<16x18xf32>
    %cst_25 = arith.constant dense<0.000000e+00> : vector<16xf32>
    %96 = vector.multi_reduction <add>, %95, %cst_25 [1] : vector<16x18xf32> to vector<16xf32>
    %97 = vector.shape_cast %96 : vector<16xf32> to vector<16x1xf32>
    %cst_26 = arith.constant 1.800000e+01 : f32
    %98 = vector.broadcast %cst_26 : f32 to vector<16x1xf32>
    %99 = arith.divf %97, %98 : vector<16x1xf32>
    %100 = arith.mulf %94, %94 : vector<16x1xf32>
    %101 = arith.subf %99, %100 : vector<16x1xf32>
    %102 = vector.broadcast %94 : vector<16x1xf32> to vector<16x18xf32>
    %103 = arith.subf %90, %102 : vector<16x18xf32>
    %cst_27 = arith.constant 9.99999974E-6 : f32
    %104 = vector.broadcast %cst_27 : f32 to vector<16x1xf32>
    %105 = arith.addf %101, %104 : vector<16x1xf32>
    %106 = math.rsqrt %105 : vector<16x1xf32>
    %107 = vector.broadcast %106 : vector<16x1xf32> to vector<16x18xf32>
    %108 = arith.mulf %103, %107 : vector<16x18xf32>
    %c0_28 = arith.constant 0 : index
    %c4 = arith.constant 4 : index
    %109 = vector.load %arg2[%c0_28, %c4] : memref<16x10xf32, #tpu.memory_space<vmem>>, vector<16x1xf32>
    %110 = vector.broadcast %109 : vector<16x1xf32> to vector<16x18xf32>
    %111 = arith.mulf %108, %110 : vector<16x18xf32>
    %c0_29 = arith.constant 0 : index
    %c5 = arith.constant 5 : index
    %112 = vector.load %arg2[%c0_29, %c5] : memref<16x10xf32, #tpu.memory_space<vmem>>, vector<16x1xf32>
    %113 = vector.broadcast %112 : vector<16x1xf32> to vector<16x18xf32>
    %114 = arith.addf %111, %113 : vector<16x18xf32>
    %115 = vector.extract_strided_slice %114 {offsets = [0, 0], sizes = [16, 2], strides = [1, 1]} : vector<16x18xf32> to vector<16x2xf32>
    %116 = vector.extract_strided_slice %114 {offsets = [0, 2], sizes = [16, 2], strides = [1, 1]} : vector<16x18xf32> to vector<16x2xf32>
    %117 = vector.extract_strided_slice %114 {offsets = [0, 4], sizes = [16, 2], strides = [1, 1]} : vector<16x18xf32> to vector<16x2xf32>
    %118 = vector.extract_strided_slice %114 {offsets = [0, 6], sizes = [16, 2], strides = [1, 1]} : vector<16x18xf32> to vector<16x2xf32>
    %119 = vector.extract_strided_slice %114 {offsets = [0, 8], sizes = [16, 2], strides = [1, 1]} : vector<16x18xf32> to vector<16x2xf32>
    %120 = vector.extract_strided_slice %114 {offsets = [0, 10], sizes = [16, 2], strides = [1, 1]} : vector<16x18xf32> to vector<16x2xf32>
    %121 = vector.extract_strided_slice %114 {offsets = [0, 12], sizes = [16, 2], strides = [1, 1]} : vector<16x18xf32> to vector<16x2xf32>
    %122 = vector.extract_strided_slice %114 {offsets = [0, 14], sizes = [16, 2], strides = [1, 1]} : vector<16x18xf32> to vector<16x2xf32>
    %123 = vector.extract_strided_slice %114 {offsets = [0, 16], sizes = [16, 2], strides = [1, 1]} : vector<16x18xf32> to vector<16x2xf32>
    %124 = tpu.concatenate %115, %116, %117, %118, %119, %120, %121, %122, %123 in 0 : vector<16x2xf32>, vector<16x2xf32>, vector<16x2xf32>, vector<16x2xf32>, vector<16x2xf32>, vector<16x2xf32>, vector<16x2xf32>, vector<16x2xf32>, vector<16x2xf32> -> vector<144x2xf32>
    %125 = arith.truncf %124 : vector<144x2xf32> to vector<144x2xbf16>
    %c0_30 = arith.constant 0 : index
    %c108 = arith.constant 108 : index
    %126 = vector.load %arg1[%c0_30, %c108] : memref<16x268xbf16, #tpu.memory_space<vmem>>, vector<16x144xbf16>
    %cst_31 = arith.constant dense<0.000000e+00> : vector<16x2xf32>
    %127 = tpu.matmul %126, %125, %cst_31 {dimension_numbers = #tpu.dot_dimension_numbers<[1], [0], [0], [1], [0, 0, 1, 1], [], []>} : vector<16x144xbf16>, vector<144x2xbf16>, vector<16x2xf32> -> vector<16x2xf32>
    %c0_32 = arith.constant 0 : index
    %c6 = arith.constant 6 : index
    %128 = vector.load %arg2[%c0_32, %c6] : memref<16x10xf32, #tpu.memory_space<vmem>>, vector<16x1xf32>
    %129 = vector.broadcast %128 : vector<16x1xf32> to vector<16x2xf32>
    %130 = arith.addf %127, %129 : vector<16x2xf32>
    %cst_33 = arith.constant 5.000000e-01 : f32
    %131 = vector.broadcast %cst_33 : f32 to vector<16x2xf32>
    %132 = arith.mulf %131, %130 : vector<16x2xf32>
    %cst_34 = arith.constant 4.471500e-02 : f32
    %133 = vector.broadcast %cst_34 : f32 to vector<16x2xf32>
    %134 = arith.mulf %133, %130 : vector<16x2xf32>
    %135 = arith.mulf %134, %130 : vector<16x2xf32>
    %136 = arith.mulf %135, %130 : vector<16x2xf32>
    %137 = arith.addf %130, %136 : vector<16x2xf32>
    %cst_35 = arith.constant 0.797884583 : f32
    %138 = vector.broadcast %cst_35 : f32 to vector<16x2xf32>
    %139 = arith.mulf %138, %137 : vector<16x2xf32>
    %140 = math.tanh %139 : vector<16x2xf32>
    %cst_36 = arith.constant 1.000000e+00 : f32
    %141 = vector.broadcast %cst_36 : f32 to vector<16x2xf32>
    %142 = arith.addf %141, %140 : vector<16x2xf32>
    %143 = arith.mulf %132, %142 : vector<16x2xf32>
    %cst_37 = arith.constant dense<0.000000e+00> : vector<16xf32>
    %144 = vector.multi_reduction <add>, %143, %cst_37 [1] : vector<16x2xf32> to vector<16xf32>
    %145 = vector.shape_cast %144 : vector<16xf32> to vector<16x1xf32>
    %cst_38 = arith.constant 2.000000e+00 : f32
    %146 = vector.broadcast %cst_38 : f32 to vector<16x1xf32>
    %147 = arith.divf %145, %146 : vector<16x1xf32>
    %148 = arith.mulf %143, %143 : vector<16x2xf32>
    %cst_39 = arith.constant dense<0.000000e+00> : vector<16xf32>
    %149 = vector.multi_reduction <add>, %148, %cst_39 [1] : vector<16x2xf32> to vector<16xf32>
    %150 = vector.shape_cast %149 : vector<16xf32> to vector<16x1xf32>
    %cst_40 = arith.constant 2.000000e+00 : f32
    %151 = vector.broadcast %cst_40 : f32 to vector<16x1xf32>
    %152 = arith.divf %150, %151 : vector<16x1xf32>
    %153 = arith.mulf %147, %147 : vector<16x1xf32>
    %154 = arith.subf %152, %153 : vector<16x1xf32>
    %155 = vector.broadcast %147 : vector<16x1xf32> to vector<16x2xf32>
    %156 = arith.subf %143, %155 : vector<16x2xf32>
    %cst_41 = arith.constant 9.99999974E-6 : f32
    %157 = vector.broadcast %cst_41 : f32 to vector<16x1xf32>
    %158 = arith.addf %154, %157 : vector<16x1xf32>
    %159 = math.rsqrt %158 : vector<16x1xf32>
    %160 = vector.broadcast %159 : vector<16x1xf32> to vector<16x2xf32>
    %161 = arith.mulf %156, %160 : vector<16x2xf32>
    %c0_42 = arith.constant 0 : index
    %c7 = arith.constant 7 : index
    %162 = vector.load %arg2[%c0_42, %c7] : memref<16x10xf32, #tpu.memory_space<vmem>>, vector<16x1xf32>
    %163 = vector.broadcast %162 : vector<16x1xf32> to vector<16x2xf32>
    %164 = arith.mulf %161, %163 : vector<16x2xf32>
    %c0_43 = arith.constant 0 : index
    %c8 = arith.constant 8 : index
    %165 = vector.load %arg2[%c0_43, %c8] : memref<16x10xf32, #tpu.memory_space<vmem>>, vector<16x1xf32>
    %166 = vector.broadcast %165 : vector<16x1xf32> to vector<16x2xf32>
    %167 = arith.addf %164, %166 : vector<16x2xf32>
    %c0_44 = arith.constant 0 : index
    %c252 = arith.constant 252 : index
    %168 = vector.load %arg1[%c0_44, %c252] : memref<16x268xbf16, #tpu.memory_space<vmem>>, vector<16x16xbf16>
    %169 = arith.truncf %167 : vector<16x2xf32> to vector<16x2xbf16>
    %cst_45 = arith.constant dense<0.000000e+00> : vector<16x2xf32>
    %170 = tpu.matmul %168, %169, %cst_45 {dimension_numbers = #tpu.dot_dimension_numbers<[1], [0], [0], [1], [0, 0, 1, 1], [], []>} : vector<16x16xbf16>, vector<16x2xbf16>, vector<16x2xf32> -> vector<16x2xf32>
    %171 = vector.extract_strided_slice %170 {offsets = [0, 0], sizes = [8, 2], strides = [1, 1]} : vector<16x2xf32> to vector<8x2xf32>
    %c0_46 = arith.constant 0 : index
    %c9 = arith.constant 9 : index
    %172 = vector.load %arg2[%c0_46, %c9] : memref<16x10xf32, #tpu.memory_space<vmem>>, vector<8x1xf32>
    %173 = vector.broadcast %172 : vector<8x1xf32> to vector<8x2xf32>
    %174 = arith.addf %171, %173 : vector<8x2xf32>
    %cst_47 = arith.constant 5.000000e-01 : f32
    %175 = vector.broadcast %cst_47 : f32 to vector<8x2xf32>
    %176 = arith.mulf %175, %174 : vector<8x2xf32>
    %cst_48 = arith.constant 4.471500e-02 : f32
    %177 = vector.broadcast %cst_48 : f32 to vector<8x2xf32>
    %178 = arith.mulf %177, %174 : vector<8x2xf32>
    %179 = arith.mulf %178, %174 : vector<8x2xf32>
    %180 = arith.mulf %179, %174 : vector<8x2xf32>
    %181 = arith.addf %174, %180 : vector<8x2xf32>
    %cst_49 = arith.constant 0.797884583 : f32
    %182 = vector.broadcast %cst_49 : f32 to vector<8x2xf32>
    %183 = arith.mulf %182, %181 : vector<8x2xf32>
    %184 = math.tanh %183 : vector<8x2xf32>
    %cst_50 = arith.constant 1.000000e+00 : f32
    %185 = vector.broadcast %cst_50 : f32 to vector<8x2xf32>
    %186 = arith.addf %185, %184 : vector<8x2xf32>
    %187 = arith.mulf %176, %186 : vector<8x2xf32>
    %c0_51 = arith.constant 0 : index
    %c0_52 = arith.constant 0 : index
    %188 = vector.load %arg3[%c0_51, %c0_52] : memref<8x2xf32, #tpu.memory_space<vmem>>, vector<8x2xf32>
    tpu.vector_store %arg3[%c0_51, %c0_52], %187 {strides = array<i32>} : memref<8x2xf32, #tpu.memory_space<vmem>>, vector<8x2xf32>,
    return
  }
}

</mosaic_0001>

<llo_original>
// kernel: inference_network_forward.1
$region0: #{inference_network_forward.1}
  #allocation0 [shape = 'u32[]', space=smem, size = 0x4, offset = 0x4, fixed_abs, tag = 'smem constant byte address 0x4 - core index']
  #allocation1 [shape = 'u32[72,128]{1,0:T(1,128)}', space=vmem, size = 0x9000, scoped, tag = 'internal scratch']
  %s0 = inlined_call_operand.vmem [shape: bf16[36,98], index: 0, kind: input, shape index: {}]
  %s1 = inlined_call_operand.vmem [shape: bf16[16,268], index: 1, kind: input, shape index: {}]
  %s2 = inlined_call_operand.vmem [shape: f32[16,10], index: 2, kind: input, shape index: {}]
  %s3 = inlined_call_operand.vmem [shape: f32[8,2], index: 3, kind: output, shape index: {}]
  %s4 = sld [smem:[#allocation0]]
  $region22: #{inference_network_forward.1} parent=0
    _
  %s6 = ssub.s32 1, %s4
  %s7 = scalar_select 0, %s6, %s4
  // Predicated region
  $region2: #{inference_network_forward.1} parent=0 // pred_check
    _
  $region3: #{inference_network_forward.1} parent=0 // pred_check_branch
    %9 = sbr.rel (0) target = $region5
  $region4: #{inference_network_forward.1} parent=0 // pred_region
    _
  $region5: #{inference_network_forward.1} parent=0 // pred_fallthru
    _
  // Predicated region
  $region6: #{inference_network_forward.1} parent=0 // pred_check
    _
  $region7: #{inference_network_forward.1} parent=0 // pred_check_branch
    %11 = sbr.rel (0) target = $region9
  $region8: #{inference_network_forward.1} parent=0 // pred_region
    _
  $region9: #{inference_network_forward.1} parent=0 // pred_fallthru
    _
  // Predicated region
  $region10: #{inference_network_forward.1} parent=0 // pred_check
    _
  $region11: #{inference_network_forward.1} parent=0 // pred_check_branch
    %13 = sbr.rel (0) target = $region13
  $region12: #{inference_network_forward.1} parent=0 // pred_region
    _
  $region13: #{inference_network_forward.1} parent=0 // pred_fallthru
    _
  %v15 = vld [vmem:[%s1] sm:$0xf]
  %v16 = vld [vmem:[%s1 + $0xc] sm:$0xf]
  %v17 = vld [vmem:[%s0] sm:$0xf]
  %v18 = vld [vmem:[%s0 + $0x4] sm:$0xf]
  %v19 = vld [vmem:[%s0 + $0x8] sm:$0xf]
  %v20 = vld [vmem:[%s0 + $0xc] sm:$0xf]
  %v21 = vld [vmem:[%s0 + $0x10] sm:$0x3]
  %v24 = vunpack.c.l.b16 %v15
  %v25 = vunpack.c.l.b16 %v16
  %v26 = vpack.c.b16 %v25, %v24
  %v32 = vunpack.c.l.b16 %v17
  %v33 = vunpack.c.l.b16 %v18
  %v34 = vunpack.c.l.b16 %v19
  %v35 = vunpack.c.l.b16 %v20
  %v36 = vunpack.c.l.b16 %v21
  %v37 = vpack.c.b16 %v33, %v32
  %v38 = vpack.c.b16 %v35, %v34
  %v39 = vpack.c.b16 %v36, %v36
  %vm42 = vcmask 293888
  %v44 = vsel %vm42, %v26, 0
  %vm46 = vcmask 1041408
  %v48 = vsel %vm46, %v39, 0
  %50 = vmatpush.bf16.msra.mxu0 0
  %51 = vmatpush.bf16.msra.mxu0 0
  %52 = vmatpush.bf16.msra.mxu0 0
  %53 = vmatpush.bf16.msra.mxu0 0
  %54 = vmatpush.bf16.msra.mxu0 0
  %55 = vmatpush.bf16.msra.mxu0 %v48
  %56 = vmatpush.bf16.msra.mxu0 %v38
  %57 = vmatpush.bf16.msra.mxu0 %v37
  %58 = vmatmul.bf16.gmra.mxu0 %v44
  %v59 = vpop.f32.mrf.mxu0
  %v60 = vadd.f32 0.0, %v59
  %v61 = vpop.f32.mrf.mxu0
  %62 = vdwg.mxu0
  %v63 = vld [vmem:[%s2] sm:$0xff]
  %65 = vset.pattern.permute.xlu0 0
  %66 = vperm.xlu0 %65, %v63
  %v67 = vpop.permute.xlu0 %66
  %v69 = vadd.f32 %v60, %v67
  %v70 = vmul.f32 %v69, 0.5
  %v71 = vmul.f32 %v69, 0.044715
  %v72 = vmul.f32 %v71, %v69
  %v73 = vmul.f32 %v72, %v69
  %v74 = vadd.f32 %v69, %v73
  %v75 = vmul.f32 %v74, 0.7978846
  %v76 = vtanh.pop %v75
  %v77 = vadd.f32 %v76, 1.0
  %v78 = vmul.f32 %v70, %v77
  %vm79 = vcmask 801792
  %v80 = vsel %vm79, %v78, 0.0
  %81 = vadd.xlane.f32.xlu0 %v80
  %v82 = vpop.xlane.xlu0 %81
  %v83 = vrcp.pop 98.0
  %v84 = vmul.f32 98.0, %v83
  %v85 = vsub.f32 1.0, %v84
  %v86 = vmul.f32 %v83, %v85
  %v87 = vadd.f32 %v83, %v86
  %vm88 = vweird.f32 %v83
  %v89 = vsel %vm88, %v83, %v87
  %v90 = vmul.f32 %v82, %v89
  %v91 = vmul.f32 %v78, %v78
  %v92 = vsel %vm79, %v91, 0.0
  %93 = vadd.xlane.f32.xlu0 %v92
  %v94 = vpop.xlane.xlu0 %93
  %v95 = vmul.f32 %v94, %v89
  %v96 = vmul.f32 %v90, %v90
  %v97 = vsub.f32 %v95, %v96
  %v98 = vsub.f32 %v78, %v90
  %v99 = vadd.f32 %v97, 1e-05
  %v100 = vrsqrt.pop %v99
  %v101 = vmul.f32 %v100, %v99
  %v102 = vmul.f32 %v101, %v100
  %v103 = vmul.f32 0.5, %v102
  %v104 = vsub.f32 1.5, %v103
  %v105 = vmul.f32 %v100, %v104
  %vm106 = vweird.f32 %v99
  %vm107 = vweird.f32 %v100
  %vm108 = vmor %vm106, %vm107
  %v109 = vsel %vm108, %v100, %v105
  %v110 = vmul.f32 %v98, %v109
  %111 = vset.pattern.permute.xlu0 1
  %112 = vperm.xlu0 %111, %v63
  %v113 = vpop.permute.xlu0 %112
  %v115 = vmul.f32 %v110, %v113
  %116 = vset.pattern.permute.xlu0 2
  %117 = vperm.xlu0 %116, %v63
  %v118 = vpop.permute.xlu0 %117
  %v120 = vadd.f32 %v115, %v118
  %122 = vrot.lane.b32.xlu0 %v120, 126
  %v123 = vpop.permute.xlu0 %122
  %125 = vrot.lane.b32.xlu0 %v120, 124
  %v126 = vpop.permute.xlu0 %125
  %vm128 = vcmask 48128
  %v129 = vsel %vm128, %v120, %v123
  %vm130 = vcmask 97280
  %v131 = vsel %vm130, %v129, %v126
  %132 = vrot.lane.b32.xlu0 %v120, 122
  %v133 = vpop.permute.xlu0 %132
  %v135 = vsel %vm128, %v123, %v126
  %v136 = vsel %vm130, %v135, %v133
  %137 = vrot.lane.b32.xlu0 %v120, 72
  %v138 = vpop.permute.xlu0 %137
  %140 = vrot.lane.b32.xlu0 %v120, 70
  %v141 = vpop.permute.xlu0 %140
  %143 = vrot.lane.b32.xlu0 %v120, 68
  %v144 = vpop.permute.xlu0 %143
  %v146 = vsel %vm128, %v138, %v141
  %v147 = vsel %vm130, %v146, %v144
  %148 = vrot.lane.b32.xlu0 %v120, 66
  %v149 = vpop.permute.xlu0 %148
  %v151 = vsel %vm128, %v141, %v144
  %v152 = vsel %vm130, %v151, %v149
  %153 = vrot.lane.b32.xlu0 %v120, 120
  %v154 = vpop.permute.xlu0 %153
  %156 = vrot.lane.b32.xlu0 %v120, 118
  %v157 = vpop.permute.xlu0 %156
  %159 = vrot.lane.b32.xlu0 %v120, 116
  %v160 = vpop.permute.xlu0 %159
  %v162 = vsel %vm128, %v154, %v157
  %v163 = vsel %vm130, %v162, %v160
  %164 = vrot.lane.b32.xlu0 %v120, 114
  %v165 = vpop.permute.xlu0 %164
  %v167 = vsel %vm128, %v157, %v160
  %v168 = vsel %vm130, %v167, %v165
  %169 = vrot.lane.b32.xlu0 %v120, 96
  %v170 = vpop.permute.xlu0 %169
  %172 = vrot.lane.b32.xlu0 %v120, 48
  %v173 = vpop.permute.xlu0 %172
  %175 = vrot.lane.b32.xlu0 %v120, 90
  %v176 = vpop.permute.xlu0 %175
  %v178 = vpack.c.bf16 %v170, %v131
  %v179 = vpack.c.bf16 %v147, %v136
  %v180 = vpack.c.bf16 %v152, %v173
  %v181 = vpack.c.bf16 %v176, %v163
  %v182 = vpack.c.bf16 %v168, %v168
  %v183 = vld [vmem:[%s2] sm:$0xff]
  %v184 = vld [vmem:[%s2 + $0x8] sm:$0xff]
  %186 = vset.pattern.permute.xlu0 3
  %187 = vperm.xlu0 %186, %v183
  %v188 = vpop.permute.xlu0 %187
  %191 = vset.pattern.permute.xlu0 3
  %192 = vperm.xlu0 %191, %v184
  %v193 = vpop.permute.xlu0 %192
  %195 = vrot.lane.b32.xlu0 %v26, 92
  %v196 = vpop.permute.xlu0 %195
  %vm197 = vcmask 588800
  %v199 = vsel %vm197, %v196, 0
  %vm201 = vcmask 1043456
  %v203 = vsel %vm201, %v182, 0
  %205 = vmatpush.bf16.msra.mxu0 0
  %206 = vmatpush.bf16.msra.mxu0 0
  %207 = vmatpush.bf16.msra.mxu0 0
  %208 = vmatpush.bf16.msra.mxu0 %v203
  %209 = vmatpush.bf16.msra.mxu0 %v181
  %210 = vmatpush.bf16.msra.mxu0 %v180
  %211 = vmatpush.bf16.msra.mxu0 %v179
  %212 = vmatpush.bf16.msra.mxu0 %v178
  %213 = vmatmul.bf16.gmra.mxu0 %v199
  %v214 = vpop.f32.mrf.mxu0
  %v215 = vadd.f32 %v188, %v214
  %v216 = vpop.f32.mrf.mxu0
  %v217 = vadd.f32 %v193, %v216
  %218 = vdwg.mxu0
  %v219 = vmul.f32 %v215, 0.5
  %v220 = vmul.f32 %v217, 0.5
  %v221 = vmul.f32 %v215, 0.044715
  %v222 = vmul.f32 %v217, 0.044715
  %v223 = vmul.f32 %v221, %v215
  %v224 = vmul.f32 %v222, %v217
  %v225 = vmul.f32 %v223, %v215
  %v226 = vmul.f32 %v224, %v217
  %v227 = vadd.f32 %v215, %v225
  %v228 = vadd.f32 %v217, %v226
  %v229 = vmul.f32 %v227, 0.7978846
  %v230 = vmul.f32 %v228, 0.7978846
  %v231 = vtanh.pop %v229
  %v232 = vtanh.pop %v230
  %v233 = vadd.f32 %v231, 1.0
  %v234 = vadd.f32 %v232, 1.0
  %v235 = vmul.f32 %v219, %v233
  %v236 = vmul.f32 %v220, %v234
  %vm237 = vcmask 146432
  %v238 = vsel %vm237, %v235, 0.0
  %239 = vadd.xlane.f32.xlu0 %v238
  %v240 = vpop.xlane.xlu0 %239
  %v241 = vsel %vm237, %v236, 0.0
  %242 = vadd.xlane.f32.xlu0 %v241
  %v243 = vpop.xlane.xlu0 %242
  %v244 = vrcp.pop 18.0
  %v245 = vmul.f32 18.0, %v244
  %v246 = vsub.f32 1.0, %v245
  %v247 = vmul.f32 %v244, %v246
  %v248 = vadd.f32 %v244, %v247
  %vm249 = vweird.f32 %v244
  %v250 = vsel %vm249, %v244, %v248
  %v251 = vmul.f32 %v240, %v250
  %v252 = vmul.f32 %v243, %v250
  %v253 = vmul.f32 %v235, %v235
  %v254 = vmul.f32 %v236, %v236
  %v255 = vsel %vm237, %v253, 0.0
  %256 = vadd.xlane.f32.xlu0 %v255
  %v257 = vpop.xlane.xlu0 %256
  %v258 = vsel %vm237, %v254, 0.0
  %259 = vadd.xlane.f32.xlu0 %v258
  %v260 = vpop.xlane.xlu0 %259
  %v261 = vmul.f32 %v257, %v250
  %v262 = vmul.f32 %v260, %v250
  %v263 = vmul.f32 %v251, %v251
  %v264 = vmul.f32 %v252, %v252
  %v265 = vsub.f32 %v261, %v263
  %v266 = vsub.f32 %v262, %v264
  %v267 = vsub.f32 %v235, %v251
  %v268 = vsub.f32 %v236, %v252
  %v269 = vadd.f32 %v265, 1e-05
  %v270 = vadd.f32 %v266, 1e-05
  %v271 = vrsqrt.pop %v269
  %v272 = vmul.f32 %v271, %v269
  %v273 = vmul.f32 %v272, %v271
  %v274 = vmul.f32 0.5, %v273
  %v275 = vsub.f32 1.5, %v274
  %v276 = vmul.f32 %v271, %v275
  %vm277 = vweird.f32 %v269
  %vm278 = vweird.f32 %v271
  %vm279 = vmor %vm277, %vm278
  %v280 = vsel %vm279, %v271, %v276
  %v281 = vrsqrt.pop %v270
  %v282 = vmul.f32 %v281, %v270
  %v283 = vmul.f32 %v282, %v281
  %v284 = vmul.f32 0.5, %v283
  %v285 = vsub.f32 1.5, %v284
  %v286 = vmul.f32 %v281, %v285
  %vm287 = vweird.f32 %v270
  %vm288 = vweird.f32 %v281
  %vm289 = vmor %vm287, %vm288
  %v290 = vsel %vm289, %v281, %v286
  %v291 = vmul.f32 %v267, %v280
  %v292 = vmul.f32 %v268, %v290
  %293 = vset.pattern.permute.xlu0 4
  %294 = vperm.xlu0 %293, %v183
  %v295 = vpop.permute.xlu0 %294
  %297 = vset.pattern.permute.xlu0 4
  %298 = vperm.xlu0 %297, %v184
  %v299 = vpop.permute.xlu0 %298
  %v301 = vmul.f32 %v291, %v295
  %v302 = vmul.f32 %v292, %v299
  %303 = vset.pattern.permute.xlu0 5
  %304 = vperm.xlu0 %303, %v183
  %v305 = vpop.permute.xlu0 %304
  %307 = vset.pattern.permute.xlu0 5
  %308 = vperm.xlu0 %307, %v184
  %v309 = vpop.permute.xlu0 %308
  %v311 = vadd.f32 %v301, %v305
  %v312 = vadd.f32 %v302, %v309
  %315 = vrot.lane.b32.xlu0 %v311, 126
  %v316 = vpop.permute.xlu0 %315
  %317 = vrot.lane.b32.xlu0 %v312, 126
  %v318 = vpop.permute.xlu0 %317
  %321 = vrot.lane.b32.xlu0 %v311, 124
  %v322 = vpop.permute.xlu0 %321
  %323 = vrot.lane.b32.xlu0 %v312, 124
  %v324 = vpop.permute.xlu0 %323
  %327 = vrot.lane.b32.xlu0 %v311, 122
  %v328 = vpop.permute.xlu0 %327
  %329 = vrot.lane.b32.xlu0 %v312, 122
  %v330 = vpop.permute.xlu0 %329
  %333 = vrot.lane.b32.xlu0 %v311, 120
  %v334 = vpop.permute.xlu0 %333
  %335 = vrot.lane.b32.xlu0 %v312, 120
  %v336 = vpop.permute.xlu0 %335
  %339 = vrot.lane.b32.xlu0 %v311, 118
  %v340 = vpop.permute.xlu0 %339
  %341 = vrot.lane.b32.xlu0 %v312, 118
  %v342 = vpop.permute.xlu0 %341
  %345 = vrot.lane.b32.xlu0 %v311, 116
  %v346 = vpop.permute.xlu0 %345
  %347 = vrot.lane.b32.xlu0 %v312, 116
  %v348 = vpop.permute.xlu0 %347
  %351 = vrot.lane.b32.xlu0 %v311, 114
  %v352 = vpop.permute.xlu0 %351
  %353 = vrot.lane.b32.xlu0 %v312, 114
  %v354 = vpop.permute.xlu0 %353
  %357 = vrot.lane.b32.xlu0 %v311, 112
  %v358 = vpop.permute.xlu0 %357
  %359 = vrot.lane.b32.xlu0 %v312, 112
  %v360 = vpop.permute.xlu0 %359
  %v363 = vpack.c.bf16 %v312, %v311
  %v364 = vpack.c.bf16 %v318, %v316
  %v365 = vpack.c.bf16 %v324, %v322
  %v366 = vpack.c.bf16 %v330, %v328
  %v367 = vpack.c.bf16 %v336, %v334
  %v368 = vpack.c.bf16 %v342, %v340
  %v369 = vpack.c.bf16 %v348, %v346
  %v370 = vpack.c.bf16 %v354, %v352
  %v371 = vpack.c.bf16 %v360, %v358
  %v372 = vld [vmem:[%s1] sm:$0xff]
  %v373 = vld [vmem:[%s1 + $0xc] sm:$0xff]
  %374 = vset.pattern.permute.xlu0 6
  %375 = vperm.xlu0 %374, %v183
  %v376 = vpop.permute.xlu0 %375
  %378 = vset.pattern.permute.xlu0 6
  %379 = vperm.xlu0 %378, %v184
  %v380 = vpop.permute.xlu0 %379
  %v384 = vunpack.c.l.b16 %v372
  %v385 = vunpack.c.h.b16 %v372
  %v386 = vunpack.c.l.b16 %v373
  %v387 = vunpack.c.h.b16 %v373
  %v388 = vpack.c.b16 %v386, %v384
  %v389 = vpack.c.b16 %v387, %v385
  %390 = vrot.lane.b32.xlu0 %v388, 20
  %v391 = vpop.permute.xlu0 %390
  %392 = vrot.lane.b32.xlu0 %v389, 20
  %v393 = vpop.permute.xlu0 %392
  %vm394 = vcmask 162816
  %v395 = vsel %vm394, %v391, %v393
  %vm397 = vcmask 130048
  %v399 = vsel %vm397, %v393, 0
  %401 = vmatpush.bf16.msra.mxu0 %v370
  %402 = vmatpush.bf16.msra.mxu0 %v369
  %403 = vmatpush.bf16.msra.mxu0 %v368
  %404 = vmatpush.bf16.msra.mxu0 %v367
  %405 = vmatpush.bf16.msra.mxu0 %v366
  %406 = vmatpush.bf16.msra.mxu0 %v365
  %407 = vmatpush.bf16.msra.mxu0 %v364
  %408 = vmatpush.bf16.msra.mxu0 %v363
  %409 = vmatmul.bf16.gmra.mxu0 %v395
  %v410 = vpop.f32.mrf.mxu0
  %v411 = vadd.f32 %v376, %v410
  %v412 = vpop.f32.mrf.mxu0
  %v413 = vadd.f32 %v380, %v412
  %414 = vdwg.mxu0
  %415 = vmatpush.bf16.msra.mxu0 0
  %416 = vmatpush.bf16.msra.mxu0 0
  %417 = vmatpush.bf16.msra.mxu0 0
  %418 = vmatpush.bf16.msra.mxu0 0
  %419 = vmatpush.bf16.msra.mxu0 0
  %420 = vmatpush.bf16.msra.mxu0 0
  %421 = vmatpush.bf16.msra.mxu0 0
  %422 = vmatpush.bf16.msra.mxu0 %v371
  %423 = vmatmul.bf16.gmra.mxu0 %v399
  %v424 = vpop.f32.mrf.mxu0
  %v425 = vadd.f32 %v411, %v424
  %v426 = vpop.f32.mrf.mxu0
  %v427 = vadd.f32 %v413, %v426
  %428 = vdwg.mxu0
  %v429 = vmul.f32 %v425, 0.5
  %v430 = vmul.f32 %v427, 0.5
  %v431 = vmul.f32 %v425, 0.044715
  %v432 = vmul.f32 %v427, 0.044715
  %v433 = vmul.f32 %v431, %v425
  %v434 = vmul.f32 %v432, %v427
  %v435 = vmul.f32 %v433, %v425
  %v436 = vmul.f32 %v434, %v427
  %v437 = vadd.f32 %v425, %v435
  %v438 = vadd.f32 %v427, %v436
  %v439 = vmul.f32 %v437, 0.7978846
  %v440 = vmul.f32 %v438, 0.7978846
  %v441 = vtanh.pop %v439
  %v442 = vtanh.pop %v440
  %v443 = vadd.f32 %v441, 1.0
  %v444 = vadd.f32 %v442, 1.0
  %v445 = vmul.f32 %v429, %v443
  %v446 = vmul.f32 %v430, %v444
  %vm447 = vcmask 15360
  %v448 = vsel %vm447, %v445, 0.0
  %449 = vadd.xlane.f32.xlu0 %v448
  %v450 = vpop.xlane.xlu0 %449
  %v451 = vsel %vm447, %v446, 0.0
  %452 = vadd.xlane.f32.xlu0 %v451
  %v453 = vpop.xlane.xlu0 %452
  %v454 = vrcp.pop 2.0
  %v455 = vmul.f32 2.0, %v454
  %v456 = vsub.f32 1.0, %v455
  %v457 = vmul.f32 %v454, %v456
  %v458 = vadd.f32 %v454, %v457
  %vm459 = vweird.f32 %v454
  %v460 = vsel %vm459, %v454, %v458
  %v461 = vmul.f32 %v450, %v460
  %v462 = vmul.f32 %v453, %v460
  %v463 = vmul.f32 %v445, %v445
  %v464 = vmul.f32 %v446, %v446
  %v465 = vsel %vm447, %v463, 0.0
  %466 = vadd.xlane.f32.xlu0 %v465
  %v467 = vpop.xlane.xlu0 %466
  %v468 = vsel %vm447, %v464, 0.0
  %469 = vadd.xlane.f32.xlu0 %v468
  %v470 = vpop.xlane.xlu0 %469
  %v471 = vmul.f32 %v467, %v460
  %v472 = vmul.f32 %v470, %v460
  %v473 = vmul.f32 %v461, %v461
  %v474 = vmul.f32 %v462, %v462
  %v475 = vsub.f32 %v471, %v473
  %v476 = vsub.f32 %v472, %v474
  %v477 = vsub.f32 %v445, %v461
  %v478 = vsub.f32 %v446, %v462
  %v479 = vadd.f32 %v475, 1e-05
  %v480 = vadd.f32 %v476, 1e-05
  %v481 = vrsqrt.pop %v479
  %v482 = vmul.f32 %v481, %v479
  %v483 = vmul.f32 %v482, %v481
  %v484 = vmul.f32 0.5, %v483
  %v485 = vsub.f32 1.5, %v484
  %v486 = vmul.f32 %v481, %v485
  %vm487 = vweird.f32 %v479
  %vm488 = vweird.f32 %v481
  %vm489 = vmor %vm487, %vm488
  %v490 = vsel %vm489, %v481, %v486
  %v491 = vrsqrt.pop %v480
  %v492 = vmul.f32 %v491, %v480
  %v493 = vmul.f32 %v492, %v491
  %v494 = vmul.f32 0.5, %v493
  %v495 = vsub.f32 1.5, %v494
  %v496 = vmul.f32 %v491, %v495
  %vm497 = vweird.f32 %v480
  %vm498 = vweird.f32 %v491
  %vm499 = vmor %vm497, %vm498
  %v500 = vsel %vm499, %v491, %v496
  %v501 = vmul.f32 %v477, %v490
  %v502 = vmul.f32 %v478, %v500
  %503 = vset.pattern.permute.xlu0 7
  %504 = vperm.xlu0 %503, %v183
  %v505 = vpop.permute.xlu0 %504
  %507 = vset.pattern.permute.xlu0 7
  %508 = vperm.xlu0 %507, %v184
  %v509 = vpop.permute.xlu0 %508
  %v511 = vmul.f32 %v501, %v505
  %v512 = vmul.f32 %v502, %v509
  %513 = vset.pattern.permute.xlu0 8
  %514 = vperm.xlu0 %513, %v183
  %v515 = vpop.permute.xlu0 %514
  %517 = vset.pattern.permute.xlu0 8
  %518 = vperm.xlu0 %517, %v184
  %v519 = vpop.permute.xlu0 %518
  %v521 = vadd.f32 %v511, %v515
  %v522 = vadd.f32 %v512, %v519
  %v523 = vld [vmem:[%s1 + $0x4] sm:$0xff]
  %v524 = vld [vmem:[%s1 + $0x10] sm:$0xff]
  %v525 = vpack.c.bf16 %v522, %v521
  %v528 = vunpack.c.l.b16 %v523
  %v529 = vunpack.c.h.b16 %v523
  %v530 = vunpack.c.l.b16 %v524
  %v531 = vunpack.c.h.b16 %v524
  %v532 = vpack.c.b16 %v530, %v528
  %v533 = vpack.c.b16 %v531, %v529
  %534 = vrot.lane.b32.xlu0 %v532, 4
  %v535 = vpop.permute.xlu0 %534
  %536 = vrot.lane.b32.xlu0 %v533, 4
  %v537 = vpop.permute.xlu0 %536
  %vm538 = vcmask 31744
  %v539 = vsel %vm538, %v535, %v537
  %v541 = vsel %vm397, %v539, 0
  %543 = vmatpush.bf16.msra.mxu0 0
  %544 = vmatpush.bf16.msra.mxu0 0
  %545 = vmatpush.bf16.msra.mxu0 0
  %546 = vmatpush.bf16.msra.mxu0 0
  %547 = vmatpush.bf16.msra.mxu0 0
  %548 = vmatpush.bf16.msra.mxu0 0
  %549 = vmatpush.bf16.msra.mxu0 0
  %550 = vmatpush.bf16.msra.mxu0 %v525
  %551 = vmatmul.bf16.gmra.mxu0 %v541
  %v552 = vpop.f32.mrf.mxu0
  %v553 = vadd.f32 0.0, %v552
  %v554 = vpop.f32.mrf.mxu0
  %555 = vdwg.mxu0
  %556 = vset.pattern.permute.xlu0 9
  %557 = vperm.xlu0 %556, %v63
  %v558 = vpop.permute.xlu0 %557
  %v560 = vadd.f32 %v553, %v558
  %v561 = vmul.f32 %v560, 0.5
  %v562 = vmul.f32 %v560, 0.044715
  %v563 = vmul.f32 %v562, %v560
  %v564 = vmul.f32 %v563, %v560
  %v565 = vadd.f32 %v560, %v564
  %v566 = vmul.f32 %v565, 0.7978846
  %v567 = vtanh.pop %v566
  %v568 = vadd.f32 %v567, 1.0
  %v569 = vmul.f32 %v561, %v568
  %570 = vst.msk [vmem:[%s3] sm:$0xff] %vm447, %v569
  // Predicated region
  $region14: #{inference_network_forward.1} parent=0 // pred_check
    _
  $region15: #{inference_network_forward.1} parent=0 // pred_check_branch
    %572 = sbr.rel (0) target = $region17
  $region16: #{inference_network_forward.1} parent=0 // pred_region
    _
  $region17: #{inference_network_forward.1} parent=0 // pred_fallthru
    _
  // Predicated region
  $region18: #{inference_network_forward.1} parent=0 // pred_check
    _
  $region19: #{inference_network_forward.1} parent=0 // pred_check_branch
    %574 = sbr.rel (0) target = $region21
  $region20: #{inference_network_forward.1} parent=0 // pred_region
    _
  $region21: #{inference_network_forward.1} parent=0 // pred_fallthru
    _

</llo_original>
